<compile_context>
chip_gen: v5e
topology: v5e:2x2
jax: 0.10.0
libtpu: 0.0.40
codegen_flags: <defaults>
</compile_context>

<pallas_src>
import jax
import jax.numpy as jnp
from jax import lax
from jax.experimental import pallas as pl
from jax.experimental.pallas import tpu as pltpu


# ---- "config" the PyTorch module references -------------------------------
HIDDEN_DIMS = [32, 64]          # config.hidden_dims
IN_DIM = 16                     # Discriminator(in_dim=16)
# Discriminator layer widths: in_dim -> reversed(hidden_dims) -> 1
LAYER_DIMS = [IN_DIM] + HIDDEN_DIMS[::-1] + [1]   # [16, 64, 32, 1]

_LANE = 128  # TPU lane width; batch tiles kept multiples of it when tiled


def _round_up(n, m):
    return ((n + m - 1) // m) * m


# ---- Pallas kernel: fused 3-layer MLP --------------------------------------
def _disc_kernel(x_ref, w1_ref, b1_ref, w2_ref, b2_ref, w3_ref, b3_ref, o_ref):
    # x tile: [bb, in_dim].  Cast once to bf16 (no-op if streamed as bf16) so
    # the MXU gets bf16 operands; accumulation is f32 everywhere.
    x = x_ref[...].astype(jnp.bfloat16)

    # Layer 1: NT contraction  w1[h1, in] . x[bb, in] -> h[h1, bb]
    # (batch goes to the lane axis -> every intermediate below is lane-dense).
    h = lax.dot_general(
        w1_ref[...], x,
        dimension_numbers=(((1,), (1,)), ((), ())),
        preferred_element_type=jnp.float32)
    h = jnp.maximum(h + b1_ref[...], 0.0)            # [h1, bb] f32 bias+ReLU

    # Layer 2: w2[h2, h1] @ h[h1, bb] -> [h2, bb]
    h = lax.dot_general(
        w2_ref[...], h.astype(jnp.bfloat16),
        dimension_numbers=(((1,), (0,)), ((), ())),
        preferred_element_type=jnp.float32)
    h = jnp.maximum(h + b2_ref[...], 0.0)            # [h2, bb] f32

    # Output head: w3[1, h2] @ h[h2, bb] -> logits [1, bb] (born lane-dense).
    logit = lax.dot_general(
        w3_ref[...], h.astype(jnp.bfloat16),
        dimension_numbers=(((1,), (0,)), ((), ())),
        preferred_element_type=jnp.float32)
    logit = logit + b3_ref[0, 0]                     # scalar bias from SMEM

    # Sigmoid; reciprocal goes to the otherwise-idle EUP slot.
    o_ref[...] = pl.reciprocal(
        1.0 + jnp.exp(-logit), approx=True).astype(o_ref.dtype)


def _choose_tile(B, block_b):
    """Batch tile size + grid length.

    Tiny batches use a single full-array block (legal for any B).  Larger
    batches use tiles that are multiples of 128 lanes (unmasked stores) and at
    least 2 grid steps so both v7x TensorCores get work.
    """
    if B <= 2 * _LANE:
        return B, 1
    bb = min(_round_up(block_b, _LANE), _round_up(pl.cdiv(B, 2), _LANE))
    return bb, pl.cdiv(B, bb)


def discriminator_forward(x, params, *, block_b=8192):
    """x: [B, in_dim] (float32 or bfloat16).
    params: list of (W[out, in], b[out]) in PyTorch nn.Linear layout.
    Returns sigmoid probabilities of shape [B, 1] (float32)."""
    (w1, b1), (w2, b2), (w3, b3) = params
    B, in_dim = x.shape

    bb, num_blocks = _choose_tile(B, block_b)
    out_w = num_blocks * bb      # output slab width (>= B); tail lanes discarded

    # MXU operands as bf16; biases stay f32, shaped [out, 1] so they broadcast
    # over the lane (batch) axis.  All tiny -> negligible wrapper cost.
    w1_b = w1.astype(jnp.bfloat16)
    w2_b = w2.astype(jnp.bfloat16)
    w3_b = w3.astype(jnp.bfloat16)
    b1_c = b1.reshape(-1, 1).astype(jnp.float32)
    b2_c = b2.reshape(-1, 1).astype(jnp.float32)
    b3_s = b3.reshape(1, 1).astype(jnp.float32)      # scalar -> SMEM

    def resident(arr):
        # Whole array, constant block index -> fetched once, VMEM-resident
        # across the grid (no per-step re-DMA).
        return pl.BlockSpec(arr.shape, lambda i: (0,) * arr.ndim)

    out_row = pl.pallas_call(
        _disc_kernel,
        out_shape=jax.ShapeDtypeStruct((1, out_w), jnp.float32),
        grid_spec=pltpu.PrefetchScalarGridSpec(
            num_scalar_prefetch=0,
            grid=(num_blocks,),
            in_specs=[
                # No wrapper padding: the last (partial) x tile may contain
                # garbage rows; they only affect output lanes >= B, which the
                # wrapper slices away.
                pl.BlockSpec((bb, in_dim), lambda i: (i, 0)),
                resident(w1_b), resident(b1_c),
                resident(w2_b), resident(b2_c),
                resident(w3_b),
                pl.BlockSpec(memory_space=pltpu.MemorySpace.SMEM),
            ],
            out_specs=pl.BlockSpec((1, bb), lambda i: (0, i)),
        ),
        compiler_params=pltpu.CompilerParams(
            dimension_semantics=("parallel",),
            vmem_limit_bytes=32 * 1024 * 1024,
        ),
        # TODO(synk): if a profile shows the x DMA exposed at very large bb,
        # add pipeline_mode=pl.Buffered(3) on the x BlockSpec.
    )(x, w1_b, b1_c, w2_b, b2_c, w3_b, b3_s)

    # Lane-dense slab -> [B, 1] (drops any tail-garbage lanes).
    return out_row[0, :B].reshape(B, 1)


# ---- Deterministic parameter construction (synthetic, no checkpoint) -------
def init_params(key):
    """PyTorch nn.Linear-style params: (W[out, in], b[out]), uniform(+-1/sqrt(fan_in))."""
    params = []
    dims = LAYER_DIMS
    for li in range(len(dims) - 1):
        key, kw, kb = jax.random.split(key, 3)
        fan_in, fan_out = dims[li], dims[li + 1]
        bound = 1.0 / (fan_in ** 0.5)
        w = jax.random.uniform(kw, (fan_out, fan_in), jnp.float32, -bound, bound)
        b = jax.random.uniform(kb, (fan_out,), jnp.float32, -bound, bound)
        params.append((w, b))
    return params


def reference_forward(x, params):
    h = x.astype(jnp.float32)
    n = len(params)
    for li, (w, b) in enumerate(params):
        h = h @ w.astype(jnp.float32).T + b
        if li < n - 1:
            h = jnp.maximum(h, 0.0)       # ReLU blocks
        else:
            h = jax.nn.sigmoid(h)         # final Sigmoid block
    return h


if __name__ == "__main__":
    key = jax.random.PRNGKey(0)
    kx, kx2, kp = jax.random.split(key, 3)
    params = init_params(kp)

    # Small batch: single full-array block.
    B = 8
    x = jax.random.normal(kx, (B, IN_DIM), jnp.float32)
    out = jax.block_until_ready(discriminator_forward(x, params))
    ref = reference_forward(x, params)
    assert out.shape == (B, 1), out.shape
    assert bool(jnp.all(jnp.isfinite(out)))
    assert jnp.allclose(out, ref, atol=5e-3, rtol=0.0), (
        "small-batch mismatch", float(jnp.max(jnp.abs(out - ref))))

    # Ragged multi-block batch: exercises the unpadded partial tail tile and
    # the >=2-step (v7x-friendly) grid.
    B2 = 300
    x2 = jax.random.normal(kx2, (B2, IN_DIM), jnp.float32)
    out2 = jax.block_until_ready(discriminator_forward(x2, params, block_b=256))
    ref2 = reference_forward(x2, params)
    assert out2.shape == (B2, 1), out2.shape
    assert bool(jnp.all(jnp.isfinite(out2)))
    assert jnp.allclose(out2, ref2, atol=5e-3, rtol=0.0), (
        "ragged-batch mismatch", float(jnp.max(jnp.abs(out2 - ref2))))

    # bf16-streamed-x path (HBM bandwidth option); accumulation stays f32.
    x_bf16 = x.astype(jnp.bfloat16)
    out_bf = jax.block_until_ready(discriminator_forward(x_bf16, params))
    ref_bf = reference_forward(x_bf16, params)
    assert out_bf.shape == (B, 1), out_bf.shape
    assert jnp.allclose(out_bf, ref_bf, atol=5e-3, rtol=0.0), (
        "bf16 mismatch", float(jnp.max(jnp.abs(out_bf - ref_bf))))

    print("KERNEL_OK")
</pallas_src>

<mosaic_0001>
module attributes {stable_mosaic.version = 11 : i64} {
  func.func @_disc_kernel(%arg0: i32, %arg1: memref<8x16xf32, #tpu.memory_space<vmem>>, %arg2: memref<64x16xbf16, #tpu.memory_space<vmem>>, %arg3: memref<64x1xf32, #tpu.memory_space<vmem>>, %arg4: memref<32x64xbf16, #tpu.memory_space<vmem>>, %arg5: memref<32x1xf32, #tpu.memory_space<vmem>>, %arg6: memref<1x32xbf16, #tpu.memory_space<vmem>>, %arg7: memref<1x1xf32, #tpu.memory_space<smem>>, %arg8: memref<1x8xf32, #tpu.memory_space<vmem>>) attributes {dimension_semantics = [#tpu.dimension_semantics<parallel>], iteration_bounds = array<i64: 1>, scalar_prefetch = 0 : i64, scratch_operands = 0 : i64, tpu.core_type = #tpu.core_type<tc>, window_params = [{transform_indices = @transform_0, window_bounds = array<i64: 8, 16>}, {pipeline_mode = #tpu.pipeline_mode<synchronous>, transform_indices = @transform_1, window_bounds = array<i64: 64, 16>}, {pipeline_mode = #tpu.pipeline_mode<synchronous>, transform_indices = @transform_2, window_bounds = array<i64: 64, 1>}, {pipeline_mode = #tpu.pipeline_mode<synchronous>, transform_indices = @transform_3, window_bounds = array<i64: 32, 64>}, {pipeline_mode = #tpu.pipeline_mode<synchronous>, transform_indices = @transform_4, window_bounds = array<i64: 32, 1>}, {pipeline_mode = #tpu.pipeline_mode<synchronous>, transform_indices = @transform_5, window_bounds = array<i64: 1, 32>}, {transform_indices = @transform_6, window_bounds = array<i64: 1, 1>}, {transform_indices = @transform_7, window_bounds = array<i64: 1, 8>}]} {
    %c0 = arith.constant 0 : index
    %c0_0 = arith.constant 0 : index
    %0 = vector.load %arg1[%c0, %c0_0] : memref<8x16xf32, #tpu.memory_space<vmem>>, vector<8x16xf32>
    %1 = arith.truncf %0 : vector<8x16xf32> to vector<8x16xbf16>
    %c0_1 = arith.constant 0 : index
    %c0_2 = arith.constant 0 : index
    %2 = vector.load %arg2[%c0_1, %c0_2] : memref<64x16xbf16, #tpu.memory_space<vmem>>, vector<64x16xbf16>
    %cst = arith.constant dense<0.000000e+00> : vector<64x8xf32>
    %3 = tpu.matmul %2, %1, %cst {dimension_numbers = #tpu.dot_dimension_numbers<[1], [1], [0], [0], [0, 0, 1, 0], [], []>} : vector<64x16xbf16>, vector<8x16xbf16>, vector<64x8xf32> -> vector<64x8xf32>
    %c0_3 = arith.constant 0 : index
    %c0_4 = arith.constant 0 : index
    %4 = vector.load %arg3[%c0_3, %c0_4] : memref<64x1xf32, #tpu.memory_space<vmem>>, vector<64x1xf32>
    %5 = vector.broadcast %4 : vector<64x1xf32> to vector<64x8xf32>
    %6 = arith.addf %3, %5 : vector<64x8xf32>
    %cst_5 = arith.constant 0.000000e+00 : f32
    %7 = vector.broadcast %cst_5 : f32 to vector<64x8xf32>
    %8 = arith.maximumf %6, %7 : vector<64x8xf32>
    %c0_6 = arith.constant 0 : index
    %c0_7 = arith.constant 0 : index
    %9 = vector.load %arg4[%c0_6, %c0_7] : memref<32x64xbf16, #tpu.memory_space<vmem>>, vector<32x64xbf16>
    %10 = arith.truncf %8 : vector<64x8xf32> to vector<64x8xbf16>
    %cst_8 = arith.constant dense<0.000000e+00> : vector<32x8xf32>
    %11 = tpu.matmul %9, %10, %cst_8 {dimension_numbers = #tpu.dot_dimension_numbers<[1], [0], [0], [1], [0, 0, 1, 1], [], []>} : vector<32x64xbf16>, vector<64x8xbf16>, vector<32x8xf32> -> vector<32x8xf32>
    %c0_9 = arith.constant 0 : index
    %c0_10 = arith.constant 0 : index
    %12 = vector.load %arg5[%c0_9, %c0_10] : memref<32x1xf32, #tpu.memory_space<vmem>>, vector<32x1xf32>
    %13 = vector.broadcast %12 : vector<32x1xf32> to vector<32x8xf32>
    %14 = arith.addf %11, %13 : vector<32x8xf32>
    %cst_11 = arith.constant 0.000000e+00 : f32
    %15 = vector.broadcast %cst_11 : f32 to vector<32x8xf32>
    %16 = arith.maximumf %14, %15 : vector<32x8xf32>
    %c0_12 = arith.constant 0 : index
    %c0_13 = arith.constant 0 : index
    %17 = vector.load %arg6[%c0_12, %c0_13] : memref<1x32xbf16, #tpu.memory_space<vmem>>, vector<1x32xbf16>
    %18 = arith.truncf %16 : vector<32x8xf32> to vector<32x8xbf16>
    %cst_14 = arith.constant dense<0.000000e+00> : vector<1x8xf32>
    %19 = tpu.matmul %17, %18, %cst_14 {dimension_numbers = #tpu.dot_dimension_numbers<[1], [0], [0], [1], [0, 0, 1, 1], [], []>} : vector<1x32xbf16>, vector<32x8xbf16>, vector<1x8xf32> -> vector<1x8xf32>
    %c0_15 = arith.constant 0 : index
    %c0_16 = arith.constant 0 : index
    %20 = memref.load %arg7[%c0_15, %c0_16] : memref<1x1xf32, #tpu.memory_space<smem>>
    %21 = vector.broadcast %20 : f32 to vector<1x8xf32>
    %22 = arith.addf %19, %21 : vector<1x8xf32>
    %cst_17 = arith.constant 0.000000e+00 : f32
    %23 = vector.broadcast %cst_17 : f32 to vector<1x8xf32>
    %24 = arith.subf %23, %22 : vector<1x8xf32>
    %25 = math.exp %24 : vector<1x8xf32>
    %cst_18 = arith.constant 1.000000e+00 : f32
    %26 = vector.broadcast %cst_18 : f32 to vector<1x8xf32>
    %27 = arith.addf %26, %25 : vector<1x8xf32>
    %28 = tpu.reciprocal %27 {approx = true} : vector<1x8xf32> -> vector<1x8xf32>
    %c0_19 = arith.constant 0 : index
    %c0_20 = arith.constant 0 : index
    %29 = vector.load %arg8[%c0_19, %c0_20] : memref<1x8xf32, #tpu.memory_space<vmem>>, vector<1x8xf32>
    tpu.vector_store %arg8[%c0_19, %c0_20], %28 {strides = array<i32>} : memref<1x8xf32, #tpu.memory_space<vmem>>, vector<1x8xf32>,
    return
  }
  func.func @transform_0(%arg0: i32) -> (i32, i32) {
    %c0_i32 = arith.constant 0 : i32
    %c0_i32_0 = arith.constant 0 : i32
    return %arg0, %c0_i32 : i32, i32
  }
  func.func @transform_1(%arg0: i32) -> (i32, i32) {
    %c0_i32 = arith.constant 0 : i32
    %c0_i32_0 = arith.constant 0 : i32
    %c0_i32_1 = arith.constant 0 : i32
    return %c0_i32, %c0_i32_0 : i32, i32
  }
  func.func @transform_2(%arg0: i32) -> (i32, i32) {
    %c0_i32 = arith.constant 0 : i32
    %c0_i32_0 = arith.constant 0 : i32
    %c0_i32_1 = arith.constant 0 : i32
    return %c0_i32, %c0_i32_0 : i32, i32
  }
  func.func @transform_3(%arg0: i32) -> (i32, i32) {
    %c0_i32 = arith.constant 0 : i32
    %c0_i32_0 = arith.constant 0 : i32
    %c0_i32_1 = arith.constant 0 : i32
    return %c0_i32, %c0_i32_0 : i32, i32
  }
  func.func @transform_4(%arg0: i32) -> (i32, i32) {
    %c0_i32 = arith.constant 0 : i32
    %c0_i32_0 = arith.constant 0 : i32
    %c0_i32_1 = arith.constant 0 : i32
    return %c0_i32, %c0_i32_0 : i32, i32
  }
  func.func @transform_5(%arg0: i32) -> (i32, i32) {
    %c0_i32 = arith.constant 0 : i32
    %c0_i32_0 = arith.constant 0 : i32
    %c0_i32_1 = arith.constant 0 : i32
    return %c0_i32, %c0_i32_0 : i32, i32
  }
  func.func @transform_6(%arg0: i32) -> (i32, i32) {
    %c0_i32 = arith.constant 0 : i32
    %c0_i32_0 = arith.constant 0 : i32
    %c0_i32_1 = arith.constant 0 : i32
    return %c0_i32, %c0_i32_0 : i32, i32
  }
  func.func @transform_7(%arg0: i32) -> (i32, i32) {
    %c0_i32 = arith.constant 0 : i32
    %c0_i32_0 = arith.constant 0 : i32
    return %c0_i32, %arg0 : i32, i32
  }
}

</mosaic_0001>

<llo_original>
// kernel: tpu_custom_call.1
$region0: #{tpu_custom_call.1}
  #allocation0 [shape = 'u32[]', space=smem, size = 0x4, offset = 0x4, fixed_abs, tag = 'smem constant byte address 0x4 - core index']
  #allocation1 [shape = 'u32[72,128]{1,0:T(1,128)}', space=vmem, size = 0x9000, scoped, tag = 'internal scratch']
  #allocation2 [shape = 'f32[1,1]{1,0:T(1,128)S(6)}', space=smem, size = 0x200, scoped, tag = 'scoped memory for tpu_custom_call.1']
  %s0 = inlined_call_operand.vmem [shape: f32[8,16], index: 0, kind: input, shape index: {}]
  %s1 = inlined_call_operand.vmem [shape: bf16[64,16], index: 1, kind: input, shape index: {}]
  %s2 = inlined_call_operand.vmem [shape: f32[64,1], index: 2, kind: input, shape index: {}]
  %s3 = inlined_call_operand.vmem [shape: bf16[32,64], index: 3, kind: input, shape index: {}]
  %s4 = inlined_call_operand.vmem [shape: f32[32,1], index: 4, kind: input, shape index: {}]
  %s5 = inlined_call_operand.vmem [shape: bf16[1,32], index: 5, kind: input, shape index: {}]
  %s6 = inlined_call_operand.<no memory space> [shape: f32[1,1], index: 6, kind: input, shape index: {}]
  %s7 = inlined_call_operand.hbm [shape: f32[1,8], index: 7, kind: output, shape index: {}]
  %s8 = sld [smem:[#allocation0]]
  $region38: #{tpu_custom_call.1} parent=0
    _
  %s10 = ssub.s32 1, %s8
  %s11 = scalar_select 0, %s10, %s8
  %12 = sst [smem:[#allocation2]] %s6
  $region1: #{tpu_custom_call.1} parent=0
    #allocation3 [shape = 'u8[512]{0}', space=vmem, size = 0x400, scoped, tag = 'output window, operand 0, single buffered']
    #allocation4 [shape = 's32[1]{0}', space=sflag, size = 0x4, scoped, tag = 'scoped memory for tpu_custom_call.1']
    %13 = vsyncpa [#allocation4], 0
    // Predicated region
    $region2: #{tpu_custom_call.1} parent=1 // pred_check
      _
    $region3: #{tpu_custom_call.1} parent=1 // pred_check_branch
      %15 = sbr.rel (0) target = $region5
    $region4: #{tpu_custom_call.1} parent=1 // pred_region
      _
    $region5: #{tpu_custom_call.1} parent=1 // pred_fallthru
      _
    // Predicated region
    $region6: #{tpu_custom_call.1} parent=1 // pred_check
      _
    $region7: #{tpu_custom_call.1} parent=1 // pred_check_branch
      %17 = sbr.rel (0) target = $region9
    $region8: #{tpu_custom_call.1} parent=1 // pred_region
      _
    $region9: #{tpu_custom_call.1} parent=1 // pred_fallthru
      _
    // Predicated region
    $region10: #{tpu_custom_call.1} parent=1 // pred_check
      _
    $region11: #{tpu_custom_call.1} parent=1 // pred_check_branch
      %19 = sbr.rel (0) target = $region13
    $region12: #{tpu_custom_call.1} parent=1 // pred_region
      _
    $region13: #{tpu_custom_call.1} parent=1 // pred_fallthru
      _
    // Predicated region
    $region14: #{tpu_custom_call.1} parent=1 // pred_check
      _
    $region15: #{tpu_custom_call.1} parent=1 // pred_check_branch
      %21 = sbr.rel (0) target = $region17
    $region16: #{tpu_custom_call.1} parent=1 // pred_region
      _
    $region17: #{tpu_custom_call.1} parent=1 // pred_fallthru
      _
    // Predicated region
    $region18: #{tpu_custom_call.1} parent=1 // pred_check
      _
    $region19: #{tpu_custom_call.1} parent=1 // pred_check_branch
      %23 = sbr.rel (0) target = $region21
    $region20: #{tpu_custom_call.1} parent=1 // pred_region
      _
    $region21: #{tpu_custom_call.1} parent=1 // pred_fallthru
      _
    // Predicated region
    $region22: #{tpu_custom_call.1} parent=1 // pred_check
      _
    $region23: #{tpu_custom_call.1} parent=1 // pred_check_branch
      %25 = sbr.rel (0) target = $region25
    $region24: #{tpu_custom_call.1} parent=1 // pred_region
      _
    $region25: #{tpu_custom_call.1} parent=1 // pred_fallthru
      _
    // Predicated region
    $region26: #{tpu_custom_call.1} parent=1 // pred_check
      _
    $region27: #{tpu_custom_call.1} parent=1 // pred_check_branch
      %27 = sbr.rel (0) target = $region29
    $region28: #{tpu_custom_call.1} parent=1 // pred_region
      _
    $region29: #{tpu_custom_call.1} parent=1 // pred_fallthru
      _
    %v29 = vld [vmem:[%s0] sm:$0xff]
    %v30 = vpack.c.bf16 %v29, %v29
    %v31 = vld [vmem:[%s1] sm:$0xf]
    %v32 = vld [vmem:[%s1 + $0x4] sm:$0xf]
    %v33 = vld [vmem:[%s1 + $0x8] sm:$0xf]
    %v34 = vld [vmem:[%s1 + $0xc] sm:$0xf]
    %v35 = vld [vmem:[%s1 + $0x10] sm:$0xf]
    %v36 = vld [vmem:[%s1 + $0x14] sm:$0xf]
    %v37 = vld [vmem:[%s1 + $0x18] sm:$0xf]
    %v38 = vld [vmem:[%s1 + $0x1c] sm:$0xf]
    %v39 = vld [vmem:[%s2] sm:$0xff]
    %v40 = vld [vmem:[%s2 + $0x8] sm:$0xff]
    %v41 = vld [vmem:[%s2 + $0x10] sm:$0xff]
    %v42 = vld [vmem:[%s2 + $0x18] sm:$0xff]
    %v43 = vld [vmem:[%s2 + $0x20] sm:$0xff]
    %v44 = vld [vmem:[%s2 + $0x28] sm:$0xff]
    %v45 = vld [vmem:[%s2 + $0x30] sm:$0xff]
    %v46 = vld [vmem:[%s2 + $0x38] sm:$0xff]
    %48 = vset.pattern.permute.xlu0 0
    %49 = vperm.xlu0 %48, %v39
    %v50 = vpop.permute.xlu0 %49
    %53 = vset.pattern.permute.xlu0 0
    %54 = vperm.xlu0 %53, %v40
    %v55 = vpop.permute.xlu0 %54
    %58 = vset.pattern.permute.xlu0 0
    %59 = vperm.xlu0 %58, %v41
    %v60 = vpop.permute.xlu0 %59
    %63 = vset.pattern.permute.xlu0 0
    %64 = vperm.xlu0 %63, %v42
    %v65 = vpop.permute.xlu0 %64
    %68 = vset.pattern.permute.xlu0 0
    %69 = vperm.xlu0 %68, %v43
    %v70 = vpop.permute.xlu0 %69
    %73 = vset.pattern.permute.xlu0 0
    %74 = vperm.xlu0 %73, %v44
    %v75 = vpop.permute.xlu0 %74
    %78 = vset.pattern.permute.xlu0 0
    %79 = vperm.xlu0 %78, %v45
    %v80 = vpop.permute.xlu0 %79
    %83 = vset.pattern.permute.xlu0 0
    %84 = vperm.xlu0 %83, %v46
    %v85 = vpop.permute.xlu0 %84
    %v95 = vunpack.c.l.b16 %v31
    %v96 = vunpack.c.l.b16 %v32
    %v97 = vunpack.c.l.b16 %v33
    %v98 = vunpack.c.l.b16 %v34
    %v99 = vunpack.c.l.b16 %v35
    %v100 = vunpack.c.l.b16 %v36
    %v101 = vunpack.c.l.b16 %v37
    %v102 = vunpack.c.l.b16 %v38
    %v103 = vpack.c.b16 %v96, %v95
    %v104 = vpack.c.b16 %v98, %v97
    %v105 = vpack.c.b16 %v100, %v99
    %v106 = vpack.c.b16 %v102, %v101
    %vm107 = vcmask 130048
    %v109 = vsel %vm107, %v103, 0
    %v112 = vsel %vm107, %v104, 0
    %v115 = vsel %vm107, %v105, 0
    %v118 = vsel %vm107, %v106, 0
    %v121 = vsel %vm107, %v30, 0
    %123 = vmatpush.bf16.xpose.msra.mxu0 0
    %124 = vmatpush.bf16.xpose.msra.mxu0 0
    %125 = vmatpush.bf16.xpose.msra.mxu0 0
    %126 = vmatpush.bf16.xpose.msra.mxu0 0
    %127 = vmatpush.bf16.xpose.msra.mxu0 0
    %128 = vmatpush.bf16.xpose.msra.mxu0 0
    %129 = vmatpush.bf16.xpose.msra.mxu0 0
    %130 = vmatpush.bf16.xpose.msra.mxu0 %v121
    %131 = vmatmul.bf16.gmra.mxu0 %v109
    %v132 = vpop.f32.mrf.mxu0
    %v133 = vadd.f32 %v50, %v132
    %v134 = vpop.f32.mrf.mxu0
    %v135 = vadd.f32 %v55, %v134
    %136 = vmatmul.bf16.gmra.mxu0 %v112
    %v137 = vpop.f32.mrf.mxu0
    %v138 = vadd.f32 %v60, %v137
    %v139 = vpop.f32.mrf.mxu0
    %v140 = vadd.f32 %v65, %v139
    %141 = vmatmul.bf16.gmra.mxu0 %v115
    %v142 = vpop.f32.mrf.mxu0
    %v143 = vadd.f32 %v70, %v142
    %v144 = vpop.f32.mrf.mxu0
    %v145 = vadd.f32 %v75, %v144
    %146 = vmatmul.bf16.gmra.mxu0 %v118
    %v147 = vpop.f32.mrf.mxu0
    %v148 = vadd.f32 %v80, %v147
    %v149 = vpop.f32.mrf.mxu0
    %v150 = vadd.f32 %v85, %v149
    %151 = vdwg.mxu0
    %v152 = vmax.f32 %v133, 0.0
    %v153 = vmax.f32 %v135, 0.0
    %v154 = vmax.f32 %v138, 0.0
    %v155 = vmax.f32 %v140, 0.0
    %v156 = vmax.f32 %v143, 0.0
    %v157 = vmax.f32 %v145, 0.0
    %v158 = vmax.f32 %v148, 0.0
    %v159 = vmax.f32 %v150, 0.0
    %v160 = vld [vmem:[%s3] sm:$0xf]
    %v161 = vld [vmem:[%s3 + $0x4] sm:$0xf]
    %v162 = vld [vmem:[%s3 + $0x8] sm:$0xf]
    %v163 = vld [vmem:[%s3 + $0xc] sm:$0xf]
    %v164 = vpack.c.bf16 %v153, %v152
    %v165 = vpack.c.bf16 %v155, %v154
    %v166 = vpack.c.bf16 %v157, %v156
    %v167 = vpack.c.bf16 %v159, %v158
    %v168 = vld [vmem:[%s4] sm:$0xff]
    %v169 = vld [vmem:[%s4 + $0x8] sm:$0xff]
    %v170 = vld [vmem:[%s4 + $0x10] sm:$0xff]
    %v171 = vld [vmem:[%s4 + $0x18] sm:$0xff]
    %173 = vset.pattern.permute.xlu0 0
    %174 = vperm.xlu0 %173, %v168
    %v175 = vpop.permute.xlu0 %174
    %178 = vset.pattern.permute.xlu0 0
    %179 = vperm.xlu0 %178, %v169
    %v180 = vpop.permute.xlu0 %179
    %183 = vset.pattern.permute.xlu0 0
    %184 = vperm.xlu0 %183, %v170
    %v185 = vpop.permute.xlu0 %184
    %188 = vset.pattern.permute.xlu0 0
    %189 = vperm.xlu0 %188, %v171
    %v190 = vpop.permute.xlu0 %189
    %v196 = vunpack.c.l.b16 %v160
    %v197 = vunpack.c.l.b16 %v161
    %v198 = vunpack.c.l.b16 %v162
    %v199 = vunpack.c.l.b16 %v163
    %v200 = vpack.c.b16 %v197, %v196
    %v201 = vpack.c.b16 %v199, %v198
    %vm202 = vcmask 523264
    %v204 = vsel %vm202, %v200, 0
    %v207 = vsel %vm202, %v201, 0
    %209 = vmatpush.bf16.msra.mxu0 0
    %210 = vmatpush.bf16.msra.mxu0 0
    %211 = vmatpush.bf16.msra.mxu0 0
    %212 = vmatpush.bf16.msra.mxu0 0
    %213 = vmatpush.bf16.msra.mxu0 %v167
    %214 = vmatpush.bf16.msra.mxu0 %v166
    %215 = vmatpush.bf16.msra.mxu0 %v165
    %216 = vmatpush.bf16.msra.mxu0 %v164
    %217 = vmatmul.bf16.gmra.mxu0 %v204
    %v218 = vpop.f32.mrf.mxu0
    %v219 = vadd.f32 %v175, %v218
    %v220 = vpop.f32.mrf.mxu0
    %v221 = vadd.f32 %v180, %v220
    %222 = vmatmul.bf16.gmra.mxu0 %v207
    %v223 = vpop.f32.mrf.mxu0
    %v224 = vadd.f32 %v185, %v223
    %v225 = vpop.f32.mrf.mxu0
    %v226 = vadd.f32 %v190, %v225
    %227 = vdwg.mxu0
    %v228 = vmax.f32 %v219, 0.0
    %v229 = vmax.f32 %v221, 0.0
    %v230 = vmax.f32 %v224, 0.0
    %v231 = vmax.f32 %v226, 0.0
    %v232 = vld [vmem:[%s5] sm:$0x1]
    %v233 = vpack.c.bf16 %v229, %v228
    %v234 = vpack.c.bf16 %v231, %v230
    %s235 = sld [smem:[#allocation2]]
    %v236 = vstv %s235
    %vm237 = vcmask 261120
    %v239 = vsel %vm237, %v232, 0
    %241 = vmatpush.bf16.msra.mxu0 0
    %242 = vmatpush.bf16.msra.mxu0 0
    %243 = vmatpush.bf16.msra.mxu0 0
    %244 = vmatpush.bf16.msra.mxu0 0
    %245 = vmatpush.bf16.msra.mxu0 0
    %246 = vmatpush.bf16.msra.mxu0 0
    %247 = vmatpush.bf16.msra.mxu0 %v234
    %248 = vmatpush.bf16.msra.mxu0 %v233
    %249 = vmatmul.bf16.gmra.mxu0 %v239
    %v250 = vpop.f32.mrf.mxu0
    %v251 = vadd.f32 %v236, %v250
    %v252 = vpop.f32.mrf.mxu0
    %253 = vdwg.mxu0
    %v254 = vsub.f32 0.0, %v251
    %v255 = vmul.f32 %v254, 1.442695
    %v256 = vpow.pop %v255
    %v257 = vadd.f32 %v256, 1.0
    %v258 = vrcp.pop %v257
    %vm259 = vcmask 57344
    %260 = vst.msk [vmem:[#allocation3] sm:$0x1] %vm259, %v258
    // Predicated region
    $region30: #{tpu_custom_call.1} parent=1 // pred_check
      _
    $region31: #{tpu_custom_call.1} parent=1 // pred_check_branch
      %262 = sbr.rel (0) target = $region33
    $region32: #{tpu_custom_call.1} parent=1 // pred_region
      %264 = vsyncadd [#allocation4], 0
      %s266 = sshll.u32 [#allocation3], 4
      %s267 = int_to_ptr.vmem [resolvable:$true] %s266
      %s268 = sshll.u32 %s7, 4
      %s269 = int_to_ptr.hbm [resolvable:$true] %s268
      %271 = dma.vmem_to_hbm [thread:$0]  %s267, 16, %s269, [#allocation4]
    $region33: #{tpu_custom_call.1} parent=1 // pred_fallthru
      _
    // Predicated region
    $region34: #{tpu_custom_call.1} parent=1 // pred_check
      _
    $region35: #{tpu_custom_call.1} parent=1 // pred_check_branch
      %273 = sbr.rel (0) target = $region37
    $region36: #{tpu_custom_call.1} parent=1 // pred_region
      %275 = dma.done [#allocation4], 16
    $region37: #{tpu_custom_call.1} parent=1 // pred_fallthru
      _
    %276 = vsyncpa [#allocation4], 1

</llo_original>
